<compile_context>
chip_gen: v7x
topology: tpu7x:2x2x1
jax: 0.10.0
libtpu: 0.0.40
codegen_flags: <defaults>
</compile_context>

<pallas_src>
import functools

import jax
import jax.numpy as jnp
from jax import lax
from jax.experimental import pallas as pl
from jax.experimental.pallas import tpu as pltpu


# ----------------------------------------------------------------------------
# Kernel: one (batch row, query tile) of single-head causal self-attention
# ----------------------------------------------------------------------------
def _head_kernel(xq_ref, xkv_ref, wqkv_ref, mask_ref, out_ref, *, hs_pad):
    # xq_ref   : (1, tq, C)        query tile of the current batch row
    # xkv_ref  : (1, T,  C)        full batch row (grid-invariant over the query axis)
    # wqkv_ref : (C, 3*hs_pad)     bf16 fused [Wq*scale | Wk | Wv], each slab 128-lane aligned
    # mask_ref : (1, tq, T)        int8 combined (causal & external) mask, nonzero = keep
    # out_ref  : (1, tq, hs_pad)
    xq = xq_ref[0].astype(jnp.bfloat16)        # (tq, C)
    xkv = xkv_ref[0].astype(jnp.bfloat16)      # (T, C)
    w = wqkv_ref[...]                          # (C, 3*hs_pad) bf16

    # Projections: MXU matmuls, f32 accumulation.  Slices of `w` are 128-lane aligned.
    q = jnp.dot(xq, w[:, :hs_pad], preferred_element_type=jnp.float32)        # (tq, hs_pad)
    kv = jnp.dot(xkv, w[:, hs_pad:], preferred_element_type=jnp.float32)      # (T, 2*hs_pad)
    k = kv[:, :hs_pad]
    v = kv[:, hs_pad:]

    # scores = q @ k^T  (scale already folded into Wq); contract head dims directly,
    # avoiding an explicit XLU transpose of k.
    scores = lax.dot_general(
        q.astype(jnp.bfloat16), k.astype(jnp.bfloat16),
        dimension_numbers=(((1,), (1,)), ((), ())),
        preferred_element_type=jnp.float32,
    )                                                                          # (tq, T)

    keep = mask_ref[0] != 0
    # Large finite negative instead of -inf: same softmax result for any row with at
    # least one kept key (masked terms underflow to exactly 0), no NaN otherwise.
    scores = jnp.where(keep, scores, jnp.float32(-1e30))

    # Numerically stable softmax in f32; reciprocal goes to the (otherwise idle) EUP.
    m = jnp.max(scores, axis=-1, keepdims=True)
    p = jnp.exp(scores - m)
    denom = jnp.sum(p, axis=-1, keepdims=True)
    wei = p * pl.reciprocal(denom, approx=True)                                # (tq, T)

    # attention dropout: identity (eval mode)

    out = jnp.dot(wei.astype(jnp.bfloat16), v.astype(jnp.bfloat16),
                  preferred_element_type=jnp.float32)                          # (tq, hs_pad)
    out_ref[0] = out.astype(out_ref.dtype)


# ----------------------------------------------------------------------------
# Wrapper
# ----------------------------------------------------------------------------
def _pick_query_tile(T):
    # Prefer 256-multiples (v6e/v7x MXU is 2x256^2); fall back to 128; else full T.
    for t in (256, 128):
        if T % t == 0:
            return t
    return T


def head_attention(x, mask, w_key, w_query, w_value):
    """One head of causal self-attention (eval mode).

    x:       (B, T, C) float
    mask:    (B, >=T, >=T) (nonzero = keep) or None
    w_key, w_query, w_value: PyTorch nn.Linear weight layout, shape (head_size, C)
    returns: (B, T, head_size) float32
    """
    B, T, C = x.shape
    hs = w_key.shape[0]
    hs_pad = ((hs + 127) // 128) * 128          # 128-lane aligned slab width
    scale = float(C) ** -0.5

    # Fused [Wq*scale | Wk | Wv] in bf16, each slab padded to a 128-lane boundary so
    # in-kernel slices at 0 / hs_pad / 2*hs_pad are free views.  Padding columns are
    # zero, so they contribute nothing to q@k^T and produce zero output columns.
    wq = (w_query.astype(jnp.float32) * scale).T                     # (C, hs), scale folded in
    wk = w_key.astype(jnp.float32).T
    wv = w_value.astype(jnp.float32).T
    wqkv = jnp.zeros((C, 3 * hs_pad), jnp.float32)
    wqkv = wqkv.at[:, 0:hs].set(wq)
    wqkv = wqkv.at[:, hs_pad:hs_pad + hs].set(wk)
    wqkv = wqkv.at[:, 2 * hs_pad:2 * hs_pad + hs].set(wv)
    wqkv = wqkv.astype(jnp.bfloat16)

    # Causal tril folded into the (int8) mask operand host-side; when mask is None only
    # a tiny grid-invariant (1, T, T) causal mask is DMA'd (no synthetic (B,T,T) ones).
    tril = jnp.tril(jnp.ones((T, T), dtype=jnp.int8))
    if mask is None:
        combined = tril[None, :, :]                                   # (1, T, T)
        mask_index_map = lambda b, qi: (0, qi, 0)
    else:
        keep = (mask[:, :T, :T] != 0) & (tril[None, :, :] != 0)
        combined = keep.astype(jnp.int8)                              # (B, T, T)
        mask_index_map = lambda b, qi: (b, qi, 0)

    tq = _pick_query_tile(T)
    grid = (B, T // tq)

    out_padded = pl.pallas_call(
        functools.partial(_head_kernel, hs_pad=hs_pad),
        out_shape=jax.ShapeDtypeStruct((B, T, hs_pad), jnp.float32),
        grid=grid,
        in_specs=[
            pl.BlockSpec((1, tq, C), lambda b, qi: (b, qi, 0)),       # x (query tile)
            pl.BlockSpec((1, T, C), lambda b, qi: (b, 0, 0)),         # x (full row, for K/V)
            pl.BlockSpec((C, 3 * hs_pad), lambda b, qi: (0, 0)),      # fused weights (resident)
            pl.BlockSpec((1, tq, T), mask_index_map),                 # combined int8 mask
        ],
        out_specs=pl.BlockSpec((1, tq, hs_pad), lambda b, qi: (b, qi, 0)),
        compiler_params=pltpu.CompilerParams(
            dimension_semantics=("parallel", "parallel"),
            vmem_limit_bytes=48 * 1024 * 1024,
        ),
    )(x, x, wqkv, combined)

    return out_padded[..., :hs]


# ----------------------------------------------------------------------------
# Pure-JAX reference (mirrors the PyTorch forward, f32)
# ----------------------------------------------------------------------------
def _head_reference(x, mask, w_key, w_query, w_value):
    B, T, C = x.shape
    q = x @ w_query.T
    k = x @ w_key.T
    v = x @ w_value.T
    wei = (q @ jnp.swapaxes(k, -2, -1)) * (C ** -0.5)
    tril = jnp.tril(jnp.ones((T, T), dtype=bool))
    wei = jnp.where(tril[None, :, :], wei, -jnp.inf)
    if mask is not None:
        wei = jnp.where(mask[:, :T, :T] != 0, wei, -jnp.inf)
    wei = jax.nn.softmax(wei, axis=-1)
    return wei @ v


# ----------------------------------------------------------------------------
# Deterministic parameter init (xavier_normal_ equivalent, PyTorch weight layout)
# ----------------------------------------------------------------------------
def _xavier_normal(key, shape, fan_in, fan_out, dtype=jnp.float32):
    std = (2.0 / (fan_in + fan_out)) ** 0.5
    return std * jax.random.normal(key, shape, dtype=dtype)


if __name__ == "__main__":
    # Small shapes implied by the module.
    B, T = 2, 8            # batch, sequence length (== block_size)
    n_embd = 32
    head_size = 8

    root = jax.random.PRNGKey(0)
    kx, kk, kq, kv = jax.random.split(root, 4)

    x = jax.random.normal(kx, (B, T, n_embd), dtype=jnp.float32)

    # External mask (nonzero = keep); mask out attention to the last key position.
    mask = jnp.ones((B, T, T), dtype=jnp.int8)
    mask = mask.at[:, :, T - 1].set(0)

    # PyTorch nn.Linear(n_embd, head_size, bias=False) weights: shape (head_size, n_embd).
    w_key = _xavier_normal(kk, (head_size, n_embd), n_embd, head_size)
    w_query = _xavier_normal(kq, (head_size, n_embd), n_embd, head_size)
    w_value = _xavier_normal(kv, (head_size, n_embd), n_embd, head_size)

    # With external mask.
    out = head_attention(x, mask, w_key, w_query, w_value)
    jax.block_until_ready(out)
    assert out.shape == (B, T, head_size)
    ref = _head_reference(x, mask, w_key, w_query, w_value)
    max_err = float(jnp.max(jnp.abs(out - ref)))
    assert max_err < 5e-2, f"max abs error (with mask) {max_err}"

    # mask=None path (causal only, no synthetic mask DMA).
    out_nm = head_attention(x, None, w_key, w_query, w_value)
    jax.block_until_ready(out_nm)
    ref_nm = _head_reference(x, None, w_key, w_query, w_value)
    max_err_nm = float(jnp.max(jnp.abs(out_nm - ref_nm)))
    assert max_err_nm < 5e-2, f"max abs error (no mask) {max_err_nm}"

    print("KERNEL_OK")
</pallas_src>

<mosaic_0001>
module attributes {stable_mosaic.version = 11 : i64} {
  func.func @_head_kernel(%arg0: i32, %arg1: i32, %arg2: memref<1x8x32xf32, #tpu.memory_space<vmem>>, %arg3: memref<1x8x32xf32, #tpu.memory_space<vmem>>, %arg4: memref<32x384xbf16, #tpu.memory_space<vmem>>, %arg5: memref<1x8x8xi8, #tpu.memory_space<vmem>>, %arg6: memref<1x8x128xf32, #tpu.memory_space<vmem>>) attributes {dimension_semantics = [#tpu.dimension_semantics<parallel>, #tpu.dimension_semantics<parallel>], iteration_bounds = array<i64: 2, 1>, scalar_prefetch = 0 : i64, scratch_operands = 0 : i64, tpu.core_type = #tpu.core_type<tc>, window_params = [{transform_indices = @transform_0, window_bounds = array<i64: 1, 8, 32>}, {transform_indices = @transform_1, window_bounds = array<i64: 1, 8, 32>}, {pipeline_mode = #tpu.pipeline_mode<synchronous>, transform_indices = @transform_2, window_bounds = array<i64: 32, 384>}, {transform_indices = @transform_3, window_bounds = array<i64: 1, 8, 8>}, {transform_indices = @transform_4, window_bounds = array<i64: 1, 8, 128>}]} {
    %c0 = arith.constant 0 : index
    %c0_0 = arith.constant 0 : index
    %c0_1 = arith.constant 0 : index
    %0 = vector.load %arg2[%c0, %c0_0, %c0_1] : memref<1x8x32xf32, #tpu.memory_space<vmem>>, vector<1x8x32xf32>
    %1 = vector.shape_cast %0 : vector<1x8x32xf32> to vector<8x32xf32>
    %2 = arith.truncf %1 : vector<8x32xf32> to vector<8x32xbf16>
    %c0_2 = arith.constant 0 : index
    %c0_3 = arith.constant 0 : index
    %c0_4 = arith.constant 0 : index
    %3 = vector.load %arg3[%c0_2, %c0_3, %c0_4] : memref<1x8x32xf32, #tpu.memory_space<vmem>>, vector<1x8x32xf32>
    %4 = vector.shape_cast %3 : vector<1x8x32xf32> to vector<8x32xf32>
    %5 = arith.truncf %4 : vector<8x32xf32> to vector<8x32xbf16>
    %c0_5 = arith.constant 0 : index
    %c0_6 = arith.constant 0 : index
    %6 = vector.load %arg4[%c0_5, %c0_6] : memref<32x384xbf16, #tpu.memory_space<vmem>>, vector<32x384xbf16>
    %7 = vector.extract_strided_slice %6 {offsets = [0, 0], sizes = [32, 128], strides = [1, 1]} : vector<32x384xbf16> to vector<32x128xbf16>
    %cst = arith.constant dense<0.000000e+00> : vector<8x128xf32>
    %8 = tpu.matmul %2, %7, %cst {dimension_numbers = #tpu.dot_dimension_numbers<[1], [0], [0], [1], [0, 0, 1, 1], [], []>} : vector<8x32xbf16>, vector<32x128xbf16>, vector<8x128xf32> -> vector<8x128xf32>
    %9 = vector.extract_strided_slice %6 {offsets = [0, 128], sizes = [32, 256], strides = [1, 1]} : vector<32x384xbf16> to vector<32x256xbf16>
    %cst_7 = arith.constant dense<0.000000e+00> : vector<8x256xf32>
    %10 = tpu.matmul %5, %9, %cst_7 {dimension_numbers = #tpu.dot_dimension_numbers<[1], [0], [0], [1], [0, 0, 1, 1], [], []>} : vector<8x32xbf16>, vector<32x256xbf16>, vector<8x256xf32> -> vector<8x256xf32>
    %11 = vector.extract_strided_slice %10 {offsets = [0, 0], sizes = [8, 128], strides = [1, 1]} : vector<8x256xf32> to vector<8x128xf32>
    %12 = vector.extract_strided_slice %10 {offsets = [0, 128], sizes = [8, 128], strides = [1, 1]} : vector<8x256xf32> to vector<8x128xf32>
    %13 = arith.truncf %8 : vector<8x128xf32> to vector<8x128xbf16>
    %14 = arith.truncf %11 : vector<8x128xf32> to vector<8x128xbf16>
    %cst_8 = arith.constant dense<0.000000e+00> : vector<8x8xf32>
    %15 = tpu.matmul %13, %14, %cst_8 {dimension_numbers = #tpu.dot_dimension_numbers<[1], [1], [0], [0], [0, 0, 1, 0], [], []>} : vector<8x128xbf16>, vector<8x128xbf16>, vector<8x8xf32> -> vector<8x8xf32>
    %c0_9 = arith.constant 0 : index
    %c0_10 = arith.constant 0 : index
    %c0_11 = arith.constant 0 : index
    %16 = vector.load %arg5[%c0_9, %c0_10, %c0_11] : memref<1x8x8xi8, #tpu.memory_space<vmem>>, vector<1x8x8xi8>
    %17 = vector.shape_cast %16 : vector<1x8x8xi8> to vector<8x8xi8>
    %c0_i8 = arith.constant 0 : i8
    %18 = vector.broadcast %c0_i8 : i8 to vector<8x8xi8>
    %19 = arith.cmpi ne, %17, %18 : vector<8x8xi8>
    %cst_12 = arith.constant -1.000000e+30 : f32
    %20 = vector.broadcast %cst_12 : f32 to vector<8x8xf32>
    %21 = arith.select %19, %15, %20 : vector<8x8xi1>, vector<8x8xf32>
    %cst_13 = arith.constant dense<0xFF800000> : vector<8xf32>
    %22 = vector.multi_reduction <maximumf>, %21, %cst_13 [1] : vector<8x8xf32> to vector<8xf32>
    %23 = vector.shape_cast %22 : vector<8xf32> to vector<8x1xf32>
    %24 = vector.broadcast %23 : vector<8x1xf32> to vector<8x8xf32>
    %25 = arith.subf %21, %24 : vector<8x8xf32>
    %26 = math.exp %25 : vector<8x8xf32>
    %cst_14 = arith.constant dense<0.000000e+00> : vector<8xf32>
    %27 = vector.multi_reduction <add>, %26, %cst_14 [1] : vector<8x8xf32> to vector<8xf32>
    %28 = vector.shape_cast %27 : vector<8xf32> to vector<8x1xf32>
    %29 = tpu.reciprocal %28 {approx = true} : vector<8x1xf32> -> vector<8x1xf32>
    %30 = vector.broadcast %29 : vector<8x1xf32> to vector<8x8xf32>
    %31 = arith.mulf %26, %30 : vector<8x8xf32>
    %32 = arith.truncf %31 : vector<8x8xf32> to vector<8x8xbf16>
    %33 = arith.truncf %12 : vector<8x128xf32> to vector<8x128xbf16>
    %cst_15 = arith.constant dense<0.000000e+00> : vector<8x128xf32>
    %34 = tpu.matmul %32, %33, %cst_15 {dimension_numbers = #tpu.dot_dimension_numbers<[1], [0], [0], [1], [0, 0, 1, 1], [], []>} : vector<8x8xbf16>, vector<8x128xbf16>, vector<8x128xf32> -> vector<8x128xf32>
    %c0_16 = arith.constant 0 : index
    %c0_17 = arith.constant 0 : index
    %c0_18 = arith.constant 0 : index
    %35 = vector.load %arg6[%c0_16, %c0_17, %c0_18] : memref<1x8x128xf32, #tpu.memory_space<vmem>>, vector<1x8x128xf32>
    %36 = vector.shape_cast %35 : vector<1x8x128xf32> to vector<8x128xf32>
    %37 = vector.shape_cast %34 : vector<8x128xf32> to vector<1x8x128xf32>
    tpu.vector_store %arg6[%c0_16, %c0_17, %c0_18], %37 {strides = array<i32>} : memref<1x8x128xf32, #tpu.memory_space<vmem>>, vector<1x8x128xf32>,
    return
  }
  func.func @transform_0(%arg0: i32, %arg1: i32) -> (i32, i32, i32) {
    %c0_i32 = arith.constant 0 : i32
    %c0_i32_0 = arith.constant 0 : i32
    return %arg0, %arg1, %c0_i32 : i32, i32, i32
  }
  func.func @transform_1(%arg0: i32, %arg1: i32) -> (i32, i32, i32) {
    %c0_i32 = arith.constant 0 : i32
    %c0_i32_0 = arith.constant 0 : i32
    %c0_i32_1 = arith.constant 0 : i32
    return %arg0, %c0_i32, %c0_i32_0 : i32, i32, i32
  }
  func.func @transform_2(%arg0: i32, %arg1: i32) -> (i32, i32) {
    %c0_i32 = arith.constant 0 : i32
    %c0_i32_0 = arith.constant 0 : i32
    %c0_i32_1 = arith.constant 0 : i32
    return %c0_i32, %c0_i32_0 : i32, i32
  }
  func.func @transform_3(%arg0: i32, %arg1: i32) -> (i32, i32, i32) {
    %c0_i32 = arith.constant 0 : i32
    %c0_i32_0 = arith.constant 0 : i32
    return %arg0, %arg1, %c0_i32 : i32, i32, i32
  }
  func.func @transform_4(%arg0: i32, %arg1: i32) -> (i32, i32, i32) {
    %c0_i32 = arith.constant 0 : i32
    %c0_i32_0 = arith.constant 0 : i32
    return %arg0, %arg1, %c0_i32 : i32, i32, i32
  }
}

</mosaic_0001>

<llo_original>
// kernel: tpu_custom_call.1
$region0: #{tpu_custom_call.1}
  #allocation0 [shape = 'u32[]', space=smem, size = 0x4, offset = 0x4, fixed_abs, tag = 'smem constant byte address 0x4 - core index']
  #allocation1 [shape = 'u32[144,128]{1,0:T(1,128)}', space=vmem, size = 0x12000, scoped, tag = 'internal scratch']
  %s0 = inlined_call_operand.hbm [shape: f32[2,8,32], index: 0, kind: input, shape index: {}]
  %s1 = inlined_call_operand.hbm [shape: f32[2,8,32], index: 1, kind: input, shape index: {}]
  %s2 = inlined_call_operand.hbm [shape: bf16[32,384], index: 2, kind: input, shape index: {}]
  %s3 = inlined_call_operand.vmem [shape: s8[2,8,8], index: 3, kind: input, shape index: {}]
  %s4 = inlined_call_operand.hbm [shape: f32[2,8,128], index: 4, kind: output, shape index: {}]
  %s5 = sld [smem:[#allocation0]]
  $region61: #{tpu_custom_call.1} parent=0
    _
  %s7 = ssub.s32 1, %s5
  %s8 = scalar_select 0, %s7, %s5
  $region1: #{tpu_custom_call.1} parent=0
    #allocation2 [shape = 'u8[8192]{0}', space=vmem, size = 0x2000, scoped, tag = 'input window, operand 0']
    #allocation3 [shape = 's32[2]{0}', space=sflag, size = 0x8, scoped, tag = 'scoped memory for tpu_custom_call.1']
    #allocation4 [shape = 's32[2]{0}', space=sflag, size = 0x8, scoped, tag = 'scoped memory for tpu_custom_call.1']
    #allocation5 [shape = 'u8[8192]{0}', space=vmem, size = 0x2000, scoped, tag = 'input window, operand 1']
    #allocation6 [shape = 's32[2]{0}', space=sflag, size = 0x8, scoped, tag = 'scoped memory for tpu_custom_call.1']
    #allocation7 [shape = 'u8[24576]{0}', space=vmem, size = 0x6000, scoped, tag = 'input window, operand 2, single buffered']
    #allocation8 [shape = 'u8[8192]{0}', space=vmem, size = 0x2000, scoped, tag = 'output window, operand 0']
    %9 = vsyncpa [#allocation3], 0
    %s10 = scalar_lea.sflag [#allocation3], 1
    %11 = vsyncpa %s10, 0
    %12 = vsyncpa [#allocation6], 0
    %s13 = scalar_lea.sflag [#allocation6], 1
    %14 = vsyncpa %s13, 0
    %15 = vsyncpa [#allocation4], 0
    %s16 = scalar_lea.sflag [#allocation4], 1
    %17 = vsyncpa %s16, 0
    loop: start=0, step=1, limit=4
    $region2: #{tpu_custom_call.1} parent=1 // loop_pre_header
      _
    $region3: #{tpu_custom_call.1} parent=1 // loop_header
      %s19 = sphi 0, %s23
      %p20 = scmp.ge.s32.totalorder %s19, 4
      %s26 = sphi 0, %s38
      %s27 = sphi 0, %s34
      %s28 = sphi 0, %s26
      %s29 = sphi 0, %s27
      %s30 = sphi 0, %s28
      %s31 = sphi 0, %s29
      %s43 = sphi 0, %s45
      %s46 = sphi 0, %s43
      %s47 = sphi 0, %s46
      %s63 = sphi 0, %s47
      %s69 = sphi 0, %s71
      %s72 = sphi 0, %s69
      %s73 = sphi 0, %s72
      %s89 = sphi 0, %s73
      %s93 = sphi 0, %s93
      %s95 = sphi 0, %s93
      %s96 = sphi 0, %s95
      %s110 = sphi 0, %s96
      %s118 = sphi 0, %s120
      %s121 = sphi 0, %s118
      %s122 = sphi 0, %s121
      %s138 = sphi 0, %s122
      %s146 = sphi 0, %s148
      %s149 = sphi 0, %s146
      %s150 = sphi 0, %s149
      %s166 = sphi 0, %s150
    $region4: #{tpu_custom_call.1} parent=1 // loop_header_branch
      %22 = sbr.rel (%p20) target = $region8
    $region5: #{tpu_custom_call.1} parent=1 // loop_body
      %s24 = ssub.s32 %s19, 1
      %s25 = ssub.s32 %s19, 2
      %s32 = sadd.s32 1, %s27
      %p33 = scmp.ge.s32.totalorder %s32, 1
      %s34 = scalar_select %p33, 0, %s32
      %s35 = sadd.s32 1, %s26
      %s36 = scalar_select %p33, %s35, %s26
      %p37 = scmp.ge.s32.totalorder %s36, 2
      %s38 = scalar_select %p37, 0, %s36
      %s39 = ssub.s32 %s26, %s38
      %s40 = ssub.s32 %s27, %s34
      %s41 = sor.u32 %s39, %s40
      %p42 = scmp.eq.s32.totalorder %s41, 0
      %s44 = sadd.s32 %s43, 1
      %s45 = scalar_select %p42, %s43, %s44
      %p48 = pneg %p42
      %p49 = scmp.eq.s32.totalorder %s19, 1
      %p50 = por %p48, %p49
      %p51 = scmp.ne.s32.totalorder %s43, %s46
      %p52 = scmp.eq.s32.totalorder %s19, 0
      %p53 = por %p51, %p52
      %p54 = scmp.ne.s32.totalorder %s43, %s46
      %p55 = scmp.eq.s32.totalorder %s24, 1
      %p56 = por %p54, %p55
      %p57 = scmp.ne.s32.totalorder %s46, %s47
      %p58 = scmp.eq.s32.totalorder %s24, 0
      %p59 = por %p57, %p58
      %p60 = scmp.ne.s32.totalorder %s46, %s47
      %p61 = scmp.eq.s32.totalorder %s25, 1
      %p62 = por %p60, %p61
      %p64 = scmp.ne.s32.totalorder %s47, %s63
      %p65 = scmp.eq.s32.totalorder %s25, 0
      %p66 = por %p64, %p65
      %s67 = ssub.s32 %s26, %s38
      %p68 = scmp.eq.s32.totalorder %s67, 0
      %s70 = sadd.s32 %s69, 1
      %s71 = scalar_select %p68, %s69, %s70
      %p74 = pneg %p68
      %p75 = scmp.eq.s32.totalorder %s19, 1
      %p76 = por %p74, %p75
      %p77 = scmp.ne.s32.totalorder %s69, %s72
      %p78 = scmp.eq.s32.totalorder %s19, 0
      %p79 = por %p77, %p78
      %p80 = scmp.ne.s32.totalorder %s69, %s72
      %p81 = scmp.eq.s32.totalorder %s24, 1
      %p82 = por %p80, %p81
      %p83 = scmp.ne.s32.totalorder %s72, %s73
      %p84 = scmp.eq.s32.totalorder %s24, 0
      %p85 = por %p83, %p84
      %p86 = scmp.ne.s32.totalorder %s72, %s73
      %p87 = scmp.eq.s32.totalorder %s25, 1
      %p88 = por %p86, %p87
      %p90 = scmp.ne.s32.totalorder %s73, %s89
      %p91 = scmp.eq.s32.totalorder %s25, 0
      %p92 = por %p90, %p91
      %s94 = sadd.s32 %s93, 1
      %p97 = scmp.eq.s32.totalorder %s19, 1
      %p98 = scmp.ne.s32.totalorder %s93, %s95
      %p99 = scmp.eq.s32.totalorder %s19, 0
      %p100 = por %p98, %p99
      %p101 = scmp.ne.s32.totalorder %s93, %s95
      %p102 = scmp.eq.s32.totalorder %s24, 1
      %p103 = por %p101, %p102
      %p104 = scmp.ne.s32.totalorder %s95, %s96
      %p105 = scmp.eq.s32.totalorder %s24, 0
      %p106 = por %p104, %p105
      %p107 = scmp.ne.s32.totalorder %s95, %s96
      %p108 = scmp.eq.s32.totalorder %s25, 1
      %p109 = por %p107, %p108
      %p111 = scmp.ne.s32.totalorder %s96, %s110
      %p112 = scmp.eq.s32.totalorder %s25, 0
      %p113 = por %p111, %p112
      %s114 = ssub.s32 %s26, %s38
      %s115 = ssub.s32 %s27, %s34
      %s116 = sor.u32 %s114, %s115
      %p117 = scmp.eq.s32.totalorder %s116, 0
      %s119 = sadd.s32 %s118, 1
      %s120 = scalar_select %p117, %s118, %s119
      %p123 = pneg %p117
      %p124 = scmp.eq.s32.totalorder %s19, 1
      %p125 = por %p123, %p124
      %p126 = scmp.ne.s32.totalorder %s118, %s121
      %p127 = scmp.eq.s32.totalorder %s19, 0
      %p128 = por %p126, %p127
      %p129 = scmp.ne.s32.totalorder %s118, %s121
      %p130 = scmp.eq.s32.totalorder %s24, 1
      %p131 = por %p129, %p130
      %p132 = scmp.ne.s32.totalorder %s121, %s122
      %p133 = scmp.eq.s32.totalorder %s24, 0
      %p134 = por %p132, %p133
      %p135 = scmp.ne.s32.totalorder %s121, %s122
      %p136 = scmp.eq.s32.totalorder %s25, 1
      %p137 = por %p135, %p136
      %p139 = scmp.ne.s32.totalorder %s122, %s138
      %p140 = scmp.eq.s32.totalorder %s25, 0
      %p141 = por %p139, %p140
      %s142 = ssub.s32 %s26, %s38
      %s143 = ssub.s32 %s27, %s34
      %s144 = sor.u32 %s142, %s143
      %p145 = scmp.eq.s32.totalorder %s144, 0
      %s147 = sadd.s32 %s146, 1
      %s148 = scalar_select %p145, %s146, %s147
      %p151 = pneg %p145
      %p152 = scmp.eq.s32.totalorder %s19, 1
      %p153 = por %p151, %p152
      %p154 = scmp.ne.s32.totalorder %s146, %s149
      %p155 = scmp.eq.s32.totalorder %s19, 0
      %p156 = por %p154, %p155
      %p157 = scmp.ne.s32.totalorder %s146, %s149
      %p158 = scmp.eq.s32.totalorder %s24, 1
      %p159 = por %p157, %p158
      %p160 = scmp.ne.s32.totalorder %s149, %s150
      %p161 = scmp.eq.s32.totalorder %s24, 0
      %p162 = por %p160, %p161
      %p163 = scmp.ne.s32.totalorder %s149, %s150
      %p164 = scmp.eq.s32.totalorder %s25, 1
      %p165 = por %p163, %p164
      %p167 = scmp.ne.s32.totalorder %s150, %s166
      %p168 = scmp.eq.s32.totalorder %s25, 0
      %p169 = por %p167, %p168
      %p170 = scmp.le.s32.totalorder 1, %s19
      %p171 = scmp.lt.s32.totalorder %s19, 3
      %p172 = pnand %p170, %p171
      %p173 = pneg %p172
      // Predicated region
      $region9: #{tpu_custom_call.1} parent=5 // pred_check
        _
      $region10: #{tpu_custom_call.1} parent=5 // pred_check_branch
        %175 = sbr.rel (%p172) target = $region12
      $region11: #{tpu_custom_call.1} parent=5 // pred_region
        %s176 = ssub.s32 %s19, 1
        // Predicated region
        $region13: #{tpu_custom_call.1} parent=11 // pred_check
          %p177 = pneg %p106
        $region14: #{tpu_custom_call.1} parent=11 // pred_check_branch
          %179 = sbr.rel (%p177) target = $region16
        $region15: #{tpu_custom_call.1} parent=11 // pred_region
          %s181 = ssub.s32 768, 768
          %182 = vsyncadd [#allocation6], %s181
          %s183 = sshll.u32 [#allocation7], 4
          %s184 = int_to_ptr.vmem [resolvable:$true] %s183
          %189 = dma.hbm_to_vmem [thread:$0]  %s2, 768, %s184, [#allocation6], 192, 192, 12
        $region16: #{tpu_custom_call.1} parent=11 // pred_fallthru
          _
      $region12: #{tpu_custom_call.1} parent=5 // pred_fallthru
        _
      %p190 = scmp.lt.s32.totalorder %s19, 2
      // Predicated region
      $region17: #{tpu_custom_call.1} parent=5 // pred_check
        %p191 = pneg %p190
      $region18: #{tpu_custom_call.1} parent=5 // pred_check_branch
        %193 = sbr.rel (%p191) target = $region20
      $region19: #{tpu_custom_call.1} parent=5 // pred_region
        // Predicated region
        $region21: #{tpu_custom_call.1} parent=19 // pred_check
          %p194 = pneg %p53
        $region22: #{tpu_custom_call.1} parent=19 // pred_check_branch
          %196 = sbr.rel (%p194) target = $region24
        $region23: #{tpu_custom_call.1} parent=19 // pred_region
          %s197 = sand.u32 %s43, 1
          %s198 = scalar_lea.sflag [#allocation3], %s197
          %s199 = sand.u32 %s43, 1
          %s200 = smul.addr %s199, 8
          %s201 = scalar_lea.vmem [#allocation2], %s200
          %s203 = ssub.s32 128, 128
          %204 = vsyncadd %s198, %s203
          %s205 = sadd.s32 %s27, %s26
          %s206 = smul.addr %s205, 128
          %s207 = scalar_lea.hbm %s0, %s206
          %s209 = sshll.u32 %s201, 4
          %s210 = int_to_ptr.vmem [resolvable:$true] %s209
          %212 = dma.hbm_to_vmem [thread:$0]  %s207, 128, %s210, %s198
        $region24: #{tpu_custom_call.1} parent=19 // pred_fallthru
          _
        // Predicated region
        $region25: #{tpu_custom_call.1} parent=19 // pred_check
          %p213 = pneg %p79
        $region26: #{tpu_custom_call.1} parent=19 // pred_check_branch
          %215 = sbr.rel (%p213) target = $region28
        $region27: #{tpu_custom_call.1} parent=19 // pred_region
          %s216 = sand.u32 %s19, 1
          %s217 = scalar_lea.sflag [#allocation6], %s216
          %s218 = sand.u32 %s69, 1
          %s219 = smul.addr %s218, 8
          %s220 = scalar_lea.vmem [#allocation5], %s219
          %s222 = ssub.s32 128, 128
          %223 = vsyncadd %s217, %s222
          %s224 = smul.addr %s26, 128
          %s225 = scalar_lea.hbm %s1, %s224
          %s227 = sshll.u32 %s220, 4
          %s228 = int_to_ptr.vmem [resolvable:$true] %s227
          %230 = dma.hbm_to_vmem [thread:$0]  %s225, 128, %s228, %s217
        $region28: #{tpu_custom_call.1} parent=19 // pred_fallthru
          _
        // Predicated region
        $region29: #{tpu_custom_call.1} parent=19 // pred_check
          %p231 = pneg %p128
        $region30: #{tpu_custom_call.1} parent=19 // pred_check_branch
          %233 = sbr.rel (%p231) target = $region32
        $region31: #{tpu_custom_call.1} parent=19 // pred_region
          %p234 = scmp.lt.s32.totalorder %s26, 1
          %s235 = scalar_select %p234, %s26, 1
          %p236 = scmp.lt.s32.totalorder %s27, 0
          %s237 = scalar_select %p236, %s27, 0
          %s238 = sadd.s32 %s237, %s235
          %s239 = smul.addr %s238, 2
          %s240 = scalar_lea.vmem %s3, %s239
        $region32: #{tpu_custom_call.1} parent=19 // pred_fallthru
          _
      $region20: #{tpu_custom_call.1} parent=5 // pred_fallthru
        _
      %p241 = scmp.le.s32.totalorder 1, %s19
      %p242 = scmp.lt.s32.totalorder %s19, 3
      %p243 = pnand %p241, %p242
      %p244 = pneg %p243
      // Predicated region
      $region33: #{tpu_custom_call.1} parent=5 // pred_check
        _
      $region34: #{tpu_custom_call.1} parent=5 // pred_check_branch
        %246 = sbr.rel (%p243) target = $region36
      $region35: #{tpu_custom_call.1} parent=5 // pred_region
        %s247 = ssub.s32 %s19, 1
        %s248 = sand.u32 %s46, 1
        %s249 = scalar_lea.sflag [#allocation3], %s248
        %s250 = sand.u32 %s46, 1
        %s251 = smul.addr %s250, 8
        %s252 = scalar_lea.vmem [#allocation2], %s251
        // Predicated region
        $region37: #{tpu_custom_call.1} parent=35 // pred_check
          %p253 = pneg %p59
        $region38: #{tpu_custom_call.1} parent=35 // pred_check_branch
          %255 = sbr.rel (%p253) target = $region40
        $region39: #{tpu_custom_call.1} parent=35 // pred_region
          %256 = dma.done %s249, 128
        $region40: #{tpu_custom_call.1} parent=35 // pred_fallthru
          _
        %s257 = sand.u32 %s24, 1
        %s258 = scalar_lea.sflag [#allocation6], %s257
        %s259 = sand.u32 %s72, 1
        %s260 = smul.addr %s259, 8
        %s261 = scalar_lea.vmem [#allocation5], %s260
        // Predicated region
        $region41: #{tpu_custom_call.1} parent=35 // pred_check
          %p262 = pneg %p85
        $region42: #{tpu_custom_call.1} parent=35 // pred_check_branch
          %264 = sbr.rel (%p262) target = $region44
        $region43: #{tpu_custom_call.1} parent=35 // pred_region
          %265 = dma.done %s258, 128
        $region44: #{tpu_custom_call.1} parent=35 // pred_fallthru
          _
        // Predicated region
        $region45: #{tpu_custom_call.1} parent=35 // pred_check
          %p266 = pneg %p106
        $region46: #{tpu_custom_call.1} parent=35 // pred_check_branch
          %268 = sbr.rel (%p266) target = $region48
        $region47: #{tpu_custom_call.1} parent=35 // pred_region
          %269 = dma.done [#allocation6], 768
        $region48: #{tpu_custom_call.1} parent=35 // pred_fallthru
          _
        %s270 = sand.u32 %s46, 1
        %s271 = scalar_lea.sflag [#allocation3], %s270
        %s272 = sand.u32 %s46, 1
        %s273 = smul.addr %s272, 8
        %s274 = scalar_lea.vmem [#allocation2], %s273
        %p275 = pneg %p59
        %p276 = pneg %p56
        %s277 = sand.u32 %s24, 1
        %s278 = scalar_lea.sflag [#allocation6], %s277
        %s279 = sand.u32 %s72, 1
        %s280 = smul.addr %s279, 8
        %s281 = scalar_lea.vmem [#allocation5], %s280
        %p282 = pneg %p85
        %p283 = pneg %p82
        %p284 = pneg %p106
        %p285 = pneg %p103
        %p286 = scmp.lt.s32.totalorder %s28, 1
        %s287 = scalar_select %p286, %s28, 1
        %p288 = scmp.lt.s32.totalorder %s29, 0
        %s289 = scalar_select %p288, %s29, 0
        %s290 = sadd.s32 %s289, %s287
        %s291 = smul.addr %s290, 2
        %s292 = scalar_lea.vmem %s3, %s291
        %p293 = pneg %p134
        %p294 = pneg %p131
        %p295 = pneg %p162
        %p296 = pneg %p159
        %s297 = sand.u32 %s149, 1
        %s298 = scalar_lea.sflag [#allocation4], %s297
        %s299 = sand.u32 %s149, 1
        %s300 = smul.addr %s299, 8
        %s301 = scalar_lea.vmem [#allocation8], %s300
        %p302 = scmp.lt.s32.totalorder %s28, 1
        %s303 = scalar_select %p302, %s28, 1
        %p304 = scmp.lt.s32.totalorder %s29, 0
        %s305 = scalar_select %p304, %s29, 0
        %s306 = sadd.s32 %s305, %s303
        %s307 = smul.addr %s306, 2
        %s308 = scalar_lea.vmem %s3, %s307
        %v312 = vld [vmem:[%s252] sm:$0xff]
        %v313 = vpack.c.bf16 %v312, %v312
        %v314 = vld [vmem:[%s261] sm:$0xff]
        %v315 = vpack.c.bf16 %v314, %v314
        %v316 = vld [vmem:[#allocation7] sm:$0xff]
        %v317 = vld [vmem:[#allocation7 + $0x8] sm:$0xf]
        %v318 = vld [vmem:[#allocation7 + $0xc] sm:$0xff]
        %v319 = vld [vmem:[#allocation7 + $0x14] sm:$0xf]
        %v320 = vld [vmem:[#allocation7 + $0x18] sm:$0xff]
        %v321 = vld [vmem:[#allocation7 + $0x20] sm:$0xf]
        %v322 = vld [vmem:[#allocation7 + $0x24] sm:$0xff]
        %v323 = vld [vmem:[#allocation7 + $0x2c] sm:$0xf]
        %v328 = vunpack.c.l.b16 %v316
        %v329 = vunpack.c.l.b16 %v318
        %v330 = vunpack.c.l.b16 %v320
        %v331 = vunpack.c.l.b16 %v322
        %v332 = vpack.c.b16 %v329, %v328
        %v333 = vpack.c.b16 %v331, %v330
        %vm336 = vcmask 261120
        %v338 = vsel %vm336, %v313, 0
        %340 = vmatprep.subr.bf16.mxu0 0
        %341 = vmatpush1.bf16.msra.mxu0 %v332
        %342 = vmatprep.subr.bf16.mxu0 0
        %343 = vmatpush1.bf16.msra.mxu0 %v333
        %344 = vmatprep.subr.bf16.mxu0 0
        %345 = vmatpush1.bf16.msra.mxu0 0
        %346 = vmatprep.subr.bf16.mxu0 0
        %347 = vmatpush1.bf16.msra.mxu0 0
        %348 = vmatprep.subr.bf16.mxu0 0
        %349 = vmatpush1.bf16.msra.mxu0 0
        %350 = vmatprep.subr.bf16.mxu0 0
        %351 = vmatpush1.bf16.msra.mxu0 0
        %352 = vmatprep.subr.bf16.mxu0 0
        %353 = vmatpush1.bf16.msra.mxu0 0
        %354 = vmatprep.subr.bf16.mxu0 0
        %355 = vmatpush1.bf16.msra.mxu0 0
        %356 = vmatprep.subr.bf16.mxu0 0
        %357 = vmatpush1.bf16.msra.mxu0 0
        %358 = vmatprep.subr.bf16.mxu0 0
        %359 = vmatpush1.bf16.msra.mxu0 0
        %360 = vmatprep.subr.bf16.mxu0 0
        %361 = vmatpush1.bf16.msra.mxu0 0
        %362 = vmatprep.subr.bf16.mxu0 0
        %363 = vmatpush1.bf16.msra.mxu0 0
        %364 = vmatprep.subr.bf16.mxu0 0
        %365 = vmatpush1.bf16.msra.mxu0 0
        %366 = vmatprep.subr.bf16.mxu0 0
        %367 = vmatpush1.bf16.msra.mxu0 0
        %368 = vmatprep.subr.bf16.mxu0 0
        %369 = vmatpush1.bf16.msra.mxu0 0
        %370 = vmatprep.subr.bf16.mxu0 0
        %371 = vmatpush1.bf16.msra.mxu0 0
        %372 = vmatprep.mubr.bf16.mxu0 0
        %373 = vmatmul.mubr.bf16.gmra.mrb[0].mxu0 %v338
        %v374 = vpop.f32.mrb[0].mxu0
        %v375 = vadd.f32 0.0, %v374
        %v376 = vpop.f32.mrb[0].mxu0
        %v377 = vpop.f32.mrb[0].mxu0
        %v378 = vpop.f32.mrb[0].mxu0
        %379 = vdwg.mxu0
        %v384 = vunpack.c.h.b16 %v316
        %v385 = vunpack.c.l.b16 %v317
        %v386 = vunpack.c.h.b16 %v318
        %v387 = vunpack.c.l.b16 %v319
        %v388 = vunpack.c.h.b16 %v320
        %v389 = vunpack.c.l.b16 %v321
        %v390 = vunpack.c.h.b16 %v322
        %v391 = vunpack.c.l.b16 %v323
        %v392 = vpack.c.b16 %v386, %v384
        %v393 = vpack.c.b16 %v387, %v385
        %v394 = vpack.c.b16 %v390, %v388
        %v395 = vpack.c.b16 %v391, %v389
        %v401 = vsel %vm336, %v315, 0
        %403 = vmatprep.subr.bf16.mxu0 %v393
        %404 = vmatpush1.bf16.msra.mxu0 %v392
        %405 = vmatprep.subr.bf16.mxu0 %v395
        %406 = vmatpush1.bf16.msra.mxu0 %v394
        %407 = vmatprep.subr.bf16.mxu0 0
        %408 = vmatpush1.bf16.msra.mxu0 0
        %409 = vmatprep.subr.bf16.mxu0 0
        %410 = vmatpush1.bf16.msra.mxu0 0
        %411 = vmatprep.subr.bf16.mxu0 0
        %412 = vmatpush1.bf16.msra.mxu0 0
        %413 = vmatprep.subr.bf16.mxu0 0
        %414 = vmatpush1.bf16.msra.mxu0 0
        %415 = vmatprep.subr.bf16.mxu0 0
        %416 = vmatpush1.bf16.msra.mxu0 0
        %417 = vmatprep.subr.bf16.mxu0 0
        %418 = vmatpush1.bf16.msra.mxu0 0
        %419 = vmatprep.subr.bf16.mxu0 0
        %420 = vmatpush1.bf16.msra.mxu0 0
        %421 = vmatprep.subr.bf16.mxu0 0
        %422 = vmatpush1.bf16.msra.mxu0 0
        %423 = vmatprep.subr.bf16.mxu0 0
        %424 = vmatpush1.bf16.msra.mxu0 0
        %425 = vmatprep.subr.bf16.mxu0 0
        %426 = vmatpush1.bf16.msra.mxu0 0
        %427 = vmatprep.subr.bf16.mxu0 0
        %428 = vmatpush1.bf16.msra.mxu0 0
        %429 = vmatprep.subr.bf16.mxu0 0
        %430 = vmatpush1.bf16.msra.mxu0 0
        %431 = vmatprep.subr.bf16.mxu0 0
        %432 = vmatpush1.bf16.msra.mxu0 0
        %433 = vmatprep.subr.bf16.mxu0 0
        %434 = vmatpush1.bf16.msra.mxu0 0
        %435 = vmatprep.mubr.bf16.mxu0 0
        %436 = vmatmul.mubr.bf16.gmra.mrb[0].mxu0 %v401
        %v437 = vpop.f32.mrb[0].mxu0
        %v438 = vadd.f32 0.0, %v437
        %v439 = vpop.f32.mrb[0].mxu0
        %v440 = vadd.f32 0.0, %v439
        %v441 = vpop.f32.mrb[0].mxu0
        %v442 = vpop.f32.mrb[0].mxu0
        %443 = vdwg.mxu0
        %v444 = vpack.c.bf16 %v375, %v375
        %v445 = vpack.c.bf16 %v438, %v438
        %446 = vmatprep.subr.bf16.mxu0 0
        %447 = vmatpush1.bf16.xpose.msra.mxu0 %v445
        %448 = vmatprep.subr.bf16.mxu0 0
        %449 = vmatpush1.bf16.xpose.msra.mxu0 0
        %450 = vmatprep.subr.bf16.mxu0 0
        %451 = vmatpush1.bf16.xpose.msra.mxu0 0
        %452 = vmatprep.subr.bf16.mxu0 0
        %453 = vmatpush1.bf16.xpose.msra.mxu0 0
        %454 = vmatprep.subr.bf16.mxu0 0
        %455 = vmatpush1.bf16.xpose.msra.mxu0 0
        %456 = vmatprep.subr.bf16.mxu0 0
        %457 = vmatpush1.bf16.xpose.msra.mxu0 0
        %458 = vmatprep.subr.bf16.mxu0 0
        %459 = vmatpush1.bf16.xpose.msra.mxu0 0
        %460 = vmatprep.subr.bf16.mxu0 0
        %461 = vmatpush1.bf16.xpose.msra.mxu0 0
        %462 = vmatprep.subr.bf16.mxu0 0
        %463 = vmatpush1.bf16.xpose.msra.mxu0 0
        %464 = vmatprep.subr.bf16.mxu0 0
        %465 = vmatpush1.bf16.xpose.msra.mxu0 0
        %466 = vmatprep.subr.bf16.mxu0 0
        %467 = vmatpush1.bf16.xpose.msra.mxu0 0
        %468 = vmatprep.subr.bf16.mxu0 0
        %469 = vmatpush1.bf16.xpose.msra.mxu0 0
        %470 = vmatprep.subr.bf16.mxu0 0
        %471 = vmatpush1.bf16.xpose.msra.mxu0 0
        %472 = vmatprep.subr.bf16.mxu0 0
        %473 = vmatpush1.bf16.xpose.msra.mxu0 0
        %474 = vmatprep.subr.bf16.mxu0 0
        %475 = vmatpush1.bf16.xpose.msra.mxu0 0
        %476 = vmatprep.subr.bf16.mxu0 0
        %477 = vmatpush1.bf16.xpose.msra.mxu0 0
        %478 = vmatprep.mubr.bf16.mxu0 0
        %479 = vmatmul.mubr.bf16.gmra.mrb[0].mxu0 %v444
        %v480 = vpop.f32.mrb[0].mxu0
        %v481 = vadd.f32 0.0, %v480
        %v482 = vpop.f32.mrb[0].mxu0
        %v483 = vpop.f32.mrb[0].mxu0
        %v484 = vpop.f32.mrb[0].mxu0
        %485 = vdwg.mxu0
        %v486 = vld [vmem:[%s308] sm:$0x3]
        %vm487 = vnez %v486
        %v488 = vsel %vm487, 16843009, 0
        %v489 = vunpack.c.0.s8 %v488
        %vm490 = vcmp.ne.s32.totalorder %v489, 0
        %v491 = vsel %vm490, %v481, -1e+30
        %vm492 = vcmask 64512
        %v493 = vsel %vm492, %v491, -inf
        %494 = vmax.xlane.f32.xlu0 %v493
        %v495 = vpop.xlane.xlu0 %494
        %v496 = vsub.f32 %v491, %v495
        %v497 = vmul.f32 %v496, 1.442695
        %v498 = vpow.pop %v497
        %v499 = vsel %vm492, %v498, 0.0
        %500 = vadd.xlane.f32.xlu0 %v499
        %v501 = vpop.xlane.xlu0 %500
        %v502 = vrcp.pop %v501
        %v503 = vmul.f32 %v498, %v502
        %v504 = vpack.c.bf16 %v503, %v503
        %v505 = vpack.c.bf16 %v440, %v440
        %v507 = vsel %vm492, %v504, 0
        %vm509 = vcmask 1043456
        %v511 = vsel %vm509, %v505, 0
        %513 = vmatprep.subr.bf16.mxu0 0
        %514 = vmatpush1.bf16.msra.mxu0 %v511
        %515 = vmatprep.subr.bf16.mxu0 0
        %516 = vmatpush1.bf16.msra.mxu0 0
        %517 = vmatprep.subr.bf16.mxu0 0
        %518 = vmatpush1.bf16.msra.mxu0 0
        %519 = vmatprep.subr.bf16.mxu0 0
        %520 = vmatpush1.bf16.msra.mxu0 0
        %521 = vmatprep.subr.bf16.mxu0 0
        %522 = vmatpush1.bf16.msra.mxu0 0
        %523 = vmatprep.subr.bf16.mxu0 0
        %524 = vmatpush1.bf16.msra.mxu0 0
        %525 = vmatprep.subr.bf16.mxu0 0
        %526 = vmatpush1.bf16.msra.mxu0 0
        %527 = vmatprep.subr.bf16.mxu0 0
        %528 = vmatpush1.bf16.msra.mxu0 0
        %529 = vmatprep.subr.bf16.mxu0 0
        %530 = vmatpush1.bf16.msra.mxu0 0
        %531 = vmatprep.subr.bf16.mxu0 0
        %532 = vmatpush1.bf16.msra.mxu0 0
        %533 = vmatprep.subr.bf16.mxu0 0
        %534 = vmatpush1.bf16.msra.mxu0 0
        %535 = vmatprep.subr.bf16.mxu0 0
        %536 = vmatpush1.bf16.msra.mxu0 0
        %537 = vmatprep.subr.bf16.mxu0 0
        %538 = vmatpush1.bf16.msra.mxu0 0
        %539 = vmatprep.subr.bf16.mxu0 0
        %540 = vmatpush1.bf16.msra.mxu0 0
        %541 = vmatprep.subr.bf16.mxu0 0
        %542 = vmatpush1.bf16.msra.mxu0 0
        %543 = vmatprep.subr.bf16.mxu0 0
        %544 = vmatpush1.bf16.msra.mxu0 0
        %545 = vmatprep.mubr.bf16.mxu0 0
        %546 = vmatmul.mubr.bf16.gmra.mrb[0].mxu0 %v507
        %v547 = vpop.f32.mrb[0].mxu0
        %v548 = vadd.f32 0.0, %v547
        %v549 = vpop.f32.mrb[0].mxu0
        %v550 = vpop.f32.mrb[0].mxu0
        %v551 = vpop.f32.mrb[0].mxu0
        %552 = vdwg.mxu0
        %553 = vst [vmem:[%s301] sm:$0xff] %v548
        %s554 = sand.u32 %s149, 1
        %s555 = scalar_lea.sflag [#allocation4], %s554
        %s556 = sand.u32 %s149, 1
        %s557 = smul.addr %s556, 8
        %s558 = scalar_lea.vmem [#allocation8], %s557
        // Predicated region
        $region49: #{tpu_custom_call.1} parent=35 // pred_check
          %p559 = pneg %p159
        $region50: #{tpu_custom_call.1} parent=35 // pred_check_branch
          %561 = sbr.rel (%p559) target = $region52
        $region51: #{tpu_custom_call.1} parent=35 // pred_region
          %s563 = ssub.s32 128, 128
          %564 = vsyncadd %s555, %s563
          %s565 = sadd.s32 %s29, %s28
          %s566 = smul.addr %s565, 128
          %s567 = scalar_lea.hbm %s4, %s566
          %s569 = sshll.u32 %s558, 4
          %s570 = int_to_ptr.vmem [resolvable:$true] %s569
          %572 = dma.vmem_to_hbm [thread:$0]  %s570, 128, %s567, %s555
        $region52: #{tpu_custom_call.1} parent=35 // pred_fallthru
          _
      $region36: #{tpu_custom_call.1} parent=5 // pred_fallthru
        _
      %p573 = scmp.le.s32.totalorder 2, %s19
      // Predicated region
      $region53: #{tpu_custom_call.1} parent=5 // pred_check
        %p574 = pneg %p573
      $region54: #{tpu_custom_call.1} parent=5 // pred_check_branch
        %576 = sbr.rel (%p574) target = $region56
      $region55: #{tpu_custom_call.1} parent=5 // pred_region
        %s577 = ssub.s32 %s19, 2
        // Predicated region
        $region57: #{tpu_custom_call.1} parent=55 // pred_check
          %p578 = pneg %p165
        $region58: #{tpu_custom_call.1} parent=55 // pred_check_branch
          %580 = sbr.rel (%p578) target = $region60
        $region59: #{tpu_custom_call.1} parent=55 // pred_region
          %s581 = sand.u32 %s150, 1
          %s582 = scalar_lea.sflag [#allocation4], %s581
          %s583 = sand.u32 %s150, 1
          %s584 = smul.addr %s583, 8
          %s585 = scalar_lea.vmem [#allocation8], %s584
          %586 = dma.done %s582, 128
        $region60: #{tpu_custom_call.1} parent=55 // pred_fallthru
          _
      $region56: #{tpu_custom_call.1} parent=5 // pred_fallthru
        _
    $region6: #{tpu_custom_call.1} parent=1 // loop_footer
      %s23 = sadd.s32 1, %s19
    $region7: #{tpu_custom_call.1} parent=1 // loop_footer_branch
      %18 = sbr.rel target = $region3
    $region8: #{tpu_custom_call.1} parent=1 // loop_exit
      _
    %587 = vsyncpa [#allocation3], 1
    %s588 = scalar_lea.sflag [#allocation3], 1
    %589 = vsyncpa %s588, 1
    %590 = vsyncpa [#allocation6], 1
    %s591 = scalar_lea.sflag [#allocation6], 1
    %592 = vsyncpa %s591, 1
    %593 = vsyncpa [#allocation4], 1
    %s594 = scalar_lea.sflag [#allocation4], 1
    %595 = vsyncpa %s594, 1

</llo_original>
